<compile_context>
chip_gen: v7x
topology: tpu7x:2x2x1
jax: 0.10.0
libtpu: 0.0.40
codegen_flags: <defaults>
</compile_context>

<pallas_src>
import functools

import jax
import jax.numpy as jnp
from jax import lax
from jax.experimental import pallas as pl
from jax.experimental.pallas import tpu as pltpu

LN_EPS = 1e-5  # PyTorch nn.LayerNorm default


def _conv1d_ln_kernel(l_out, xp_ref, w_ref, g_ref, b_ref, o_ref):
    """One batch element: Conv1d(k=3, s=2, p=1 pre-applied) + LayerNorm(2D).

    xp_ref: (L+2, D)    zero-padded input rows (padding applied once in wrapper)
    w_ref : (3, D, 2D)  per-tap weights, w_ref[j][c, o] == conv_w[o, c, j]
    g_ref, b_ref: (1, 2D)  LayerNorm affine params
    o_ref : (L_out, 2D)
    """
    d_out = o_ref.shape[-1]
    acc = jnp.zeros((l_out, d_out), jnp.float32)
    # Output row t needs padded rows 2t, 2t+1, 2t+2: three strided-slice
    # matmuls accumulated in f32 (in-kernel im2col, no HBM expansion).
    for j in range(3):
        xs = xp_ref[pl.ds(j, l_out, stride=2), :].astype(jnp.float32)
        acc = acc + jnp.dot(xs, w_ref[j].astype(jnp.float32),
                            preferred_element_type=jnp.float32)
    # LayerNorm over the channel (lane) dim.
    mu = jnp.mean(acc, axis=-1, keepdims=True)
    var = jnp.mean((acc - mu) ** 2, axis=-1, keepdims=True)
    y = (acc - mu) * lax.rsqrt(var + LN_EPS)
    y = y * g_ref[...].astype(jnp.float32) + b_ref[...].astype(jnp.float32)
    o_ref[...] = y.astype(o_ref.dtype)


def conv_downsampler(x, conv_w, gamma, beta):
    """x: (B, L, D); conv_w: (2D, D, 3) (PyTorch Conv1d weight layout);
    gamma/beta: (2D,).  Returns (B, L_out, 2D) in x.dtype."""
    B, L, D = x.shape
    d_out = conv_w.shape[0]
    assert conv_w.shape == (d_out, D, 3) and d_out == 2 * D
    l_out = (L - 1) // 2 + 1
    lp = L + 2

    x_pad = jnp.pad(x, ((0, 0), (1, 1), (0, 0)))            # (B, L+2, D), zeros
    w_taps = jnp.transpose(conv_w, (2, 1, 0))               # (3, D, 2D)
    g2 = gamma.reshape(1, d_out)
    b2 = beta.reshape(1, d_out)

    # Explicit VMEM budget: double-buffered in/out blocks + weights + f32
    # intermediates, 2x headroom, clamped to [4 MiB, 48 MiB] (safe on v7x).
    est = 4 * (2 * lp * D + 2 * l_out * d_out
               + 2 * (3 * D * d_out + 2 * d_out) + 4 * l_out * d_out)
    vmem_limit = int(min(max(2 * est, 4 << 20), 48 << 20))

    kernel = functools.partial(_conv1d_ln_kernel, l_out)
    return pl.pallas_call(
        kernel,
        out_shape=jax.ShapeDtypeStruct((B, l_out, d_out), x.dtype),
        grid=(B,),
        in_specs=[
            pl.BlockSpec((None, lp, D), lambda b: (b, 0, 0)),      # activations
            pl.BlockSpec((3, D, d_out), lambda b: (0, 0, 0)),      # tap weights
            pl.BlockSpec((1, d_out), lambda b: (0, 0)),            # gamma
            pl.BlockSpec((1, d_out), lambda b: (0, 0)),            # beta
        ],
        out_specs=pl.BlockSpec((None, l_out, d_out), lambda b: (b, 0, 0)),
        compiler_params=pltpu.CompilerParams(
            dimension_semantics=("parallel",),
            vmem_limit_bytes=vmem_limit),
    )(x_pad, w_taps, g2, b2)


def _reference(x, conv_w, gamma, beta):
    """Pure-JAX reference: permute -> Conv1d -> permute -> LayerNorm."""
    xt = jnp.transpose(x, (0, 2, 1))                          # (B, D, L)
    y = lax.conv_general_dilated(
        xt, conv_w, window_strides=(2,), padding=((1, 1),),
        dimension_numbers=("NCH", "OIH", "NCH"))              # (B, 2D, L_out)
    y = jnp.transpose(y, (0, 2, 1))                           # (B, L_out, 2D)
    mu = jnp.mean(y, axis=-1, keepdims=True)
    var = jnp.mean((y - mu) ** 2, axis=-1, keepdims=True)
    return (y - mu) / jnp.sqrt(var + LN_EPS) * gamma + beta


if __name__ == "__main__":
    B, L, D = 2, 16, 64          # 2D == 128 -> lane-dense output writeback
    key = jax.random.PRNGKey(0)
    kx, kw, kg, kb = jax.random.split(key, 4)
    x = jax.random.normal(kx, (B, L, D), jnp.float32)
    conv_w = jax.random.normal(kw, (2 * D, D, 3), jnp.float32) / jnp.sqrt(3.0 * D)
    gamma = 1.0 + 0.1 * jax.random.normal(kg, (2 * D,), jnp.float32)
    beta = 0.1 * jax.random.normal(kb, (2 * D,), jnp.float32)

    out = jax.block_until_ready(conv_downsampler(x, conv_w, gamma, beta))
    ref = jax.block_until_ready(_reference(x, conv_w, gamma, beta))

    l_out = (L - 1) // 2 + 1
    assert out.shape == (B, l_out, 2 * D)
    assert bool(jnp.all(jnp.isfinite(out)))
    max_err = float(jnp.max(jnp.abs(out - ref)))
    assert bool(jnp.allclose(out, ref, atol=1e-2, rtol=1e-2)), max_err
    print("KERNEL_OK")
</pallas_src>

<mosaic_0001>
module attributes {stable_mosaic.version = 11 : i64} {
  func.func @_conv1d_ln_kernel(%arg0: i32, %arg1: memref<1x18x64xf32, #tpu.memory_space<vmem>>, %arg2: memref<3x64x128xf32, #tpu.memory_space<vmem>>, %arg3: memref<1x128xf32, #tpu.memory_space<vmem>>, %arg4: memref<1x128xf32, #tpu.memory_space<vmem>>, %arg5: memref<1x8x128xf32, #tpu.memory_space<vmem>>) attributes {dimension_semantics = [#tpu.dimension_semantics<parallel>], iteration_bounds = array<i64: 2>, scalar_prefetch = 0 : i64, scratch_operands = 0 : i64, tpu.core_type = #tpu.core_type<tc>, window_params = [{transform_indices = @transform_0, window_bounds = array<i64: 1, 18, 64>}, {pipeline_mode = #tpu.pipeline_mode<synchronous>, transform_indices = @transform_1, window_bounds = array<i64: 3, 64, 128>}, {pipeline_mode = #tpu.pipeline_mode<synchronous>, transform_indices = @transform_2, window_bounds = array<i64: 1, 128>}, {pipeline_mode = #tpu.pipeline_mode<synchronous>, transform_indices = @transform_3, window_bounds = array<i64: 1, 128>}, {transform_indices = @transform_4, window_bounds = array<i64: 1, 8, 128>}]} {
    %cst = arith.constant 0.000000e+00 : f32
    %0 = vector.broadcast %cst : f32 to vector<8x128xf32>
    %c0 = arith.constant 0 : index
    %c0_0 = arith.constant 0 : index
    %c0_1 = arith.constant 0 : index
    %1 = tpu.strided_load %arg1[%c0, %c0_0, %c0_1] {strides = array<i32: 1, 2, 1>} : memref<1x18x64xf32, #tpu.memory_space<vmem>>, vector<1x8x64xf32>
    %2 = vector.shape_cast %1 : vector<1x8x64xf32> to vector<8x64xf32>
    %c0_2 = arith.constant 0 : index
    %c0_3 = arith.constant 0 : index
    %c0_4 = arith.constant 0 : index
    %3 = vector.load %arg2[%c0_2, %c0_3, %c0_4] : memref<3x64x128xf32, #tpu.memory_space<vmem>>, vector<1x64x128xf32>
    %4 = vector.shape_cast %3 : vector<1x64x128xf32> to vector<64x128xf32>
    %cst_5 = arith.constant dense<0.000000e+00> : vector<8x128xf32>
    %5 = tpu.matmul %2, %4, %cst_5 {dimension_numbers = #tpu.dot_dimension_numbers<[1], [0], [0], [1], [0, 0, 1, 1], [], []>} : vector<8x64xf32>, vector<64x128xf32>, vector<8x128xf32> -> vector<8x128xf32>
    %6 = arith.addf %0, %5 : vector<8x128xf32>
    %c0_6 = arith.constant 0 : index
    %c1 = arith.constant 1 : index
    %c0_7 = arith.constant 0 : index
    %7 = tpu.strided_load %arg1[%c0_6, %c1, %c0_7] {strides = array<i32: 1, 2, 1>} : memref<1x18x64xf32, #tpu.memory_space<vmem>>, vector<1x8x64xf32>
    %8 = vector.shape_cast %7 : vector<1x8x64xf32> to vector<8x64xf32>
    %c1_8 = arith.constant 1 : index
    %c0_9 = arith.constant 0 : index
    %c0_10 = arith.constant 0 : index
    %9 = vector.load %arg2[%c1_8, %c0_9, %c0_10] : memref<3x64x128xf32, #tpu.memory_space<vmem>>, vector<1x64x128xf32>
    %10 = vector.shape_cast %9 : vector<1x64x128xf32> to vector<64x128xf32>
    %cst_11 = arith.constant dense<0.000000e+00> : vector<8x128xf32>
    %11 = tpu.matmul %8, %10, %cst_11 {dimension_numbers = #tpu.dot_dimension_numbers<[1], [0], [0], [1], [0, 0, 1, 1], [], []>} : vector<8x64xf32>, vector<64x128xf32>, vector<8x128xf32> -> vector<8x128xf32>
    %12 = arith.addf %6, %11 : vector<8x128xf32>
    %c0_12 = arith.constant 0 : index
    %c2 = arith.constant 2 : index
    %c0_13 = arith.constant 0 : index
    %13 = tpu.strided_load %arg1[%c0_12, %c2, %c0_13] {strides = array<i32: 1, 2, 1>} : memref<1x18x64xf32, #tpu.memory_space<vmem>>, vector<1x8x64xf32>
    %14 = vector.shape_cast %13 : vector<1x8x64xf32> to vector<8x64xf32>
    %c2_14 = arith.constant 2 : index
    %c0_15 = arith.constant 0 : index
    %c0_16 = arith.constant 0 : index
    %15 = vector.load %arg2[%c2_14, %c0_15, %c0_16] : memref<3x64x128xf32, #tpu.memory_space<vmem>>, vector<1x64x128xf32>
    %16 = vector.shape_cast %15 : vector<1x64x128xf32> to vector<64x128xf32>
    %cst_17 = arith.constant dense<0.000000e+00> : vector<8x128xf32>
    %17 = tpu.matmul %14, %16, %cst_17 {dimension_numbers = #tpu.dot_dimension_numbers<[1], [0], [0], [1], [0, 0, 1, 1], [], []>} : vector<8x64xf32>, vector<64x128xf32>, vector<8x128xf32> -> vector<8x128xf32>
    %18 = arith.addf %12, %17 : vector<8x128xf32>
    %cst_18 = arith.constant dense<0.000000e+00> : vector<8xf32>
    %19 = vector.multi_reduction <add>, %18, %cst_18 [1] : vector<8x128xf32> to vector<8xf32>
    %20 = vector.shape_cast %19 : vector<8xf32> to vector<8x1xf32>
    %cst_19 = arith.constant 1.280000e+02 : f32
    %21 = vector.broadcast %cst_19 : f32 to vector<8x1xf32>
    %22 = arith.divf %20, %21 : vector<8x1xf32>
    %23 = vector.broadcast %22 : vector<8x1xf32> to vector<8x128xf32>
    %24 = arith.subf %18, %23 : vector<8x128xf32>
    %25 = arith.mulf %24, %24 : vector<8x128xf32>
    %cst_20 = arith.constant dense<0.000000e+00> : vector<8xf32>
    %26 = vector.multi_reduction <add>, %25, %cst_20 [1] : vector<8x128xf32> to vector<8xf32>
    %27 = vector.shape_cast %26 : vector<8xf32> to vector<8x1xf32>
    %cst_21 = arith.constant 1.280000e+02 : f32
    %28 = vector.broadcast %cst_21 : f32 to vector<8x1xf32>
    %29 = arith.divf %27, %28 : vector<8x1xf32>
    %30 = vector.broadcast %22 : vector<8x1xf32> to vector<8x128xf32>
    %31 = arith.subf %18, %30 : vector<8x128xf32>
    %cst_22 = arith.constant 9.99999974E-6 : f32
    %32 = vector.broadcast %cst_22 : f32 to vector<8x1xf32>
    %33 = arith.addf %29, %32 : vector<8x1xf32>
    %34 = math.rsqrt %33 : vector<8x1xf32>
    %35 = vector.broadcast %34 : vector<8x1xf32> to vector<8x128xf32>
    %36 = arith.mulf %31, %35 : vector<8x128xf32>
    %c0_23 = arith.constant 0 : index
    %c0_24 = arith.constant 0 : index
    %37 = vector.load %arg3[%c0_23, %c0_24] : memref<1x128xf32, #tpu.memory_space<vmem>>, vector<1x128xf32>
    %38 = vector.broadcast %37 : vector<1x128xf32> to vector<8x128xf32>
    %39 = arith.mulf %36, %38 : vector<8x128xf32>
    %c0_25 = arith.constant 0 : index
    %c0_26 = arith.constant 0 : index
    %40 = vector.load %arg4[%c0_25, %c0_26] : memref<1x128xf32, #tpu.memory_space<vmem>>, vector<1x128xf32>
    %41 = vector.broadcast %40 : vector<1x128xf32> to vector<8x128xf32>
    %42 = arith.addf %39, %41 : vector<8x128xf32>
    %c0_27 = arith.constant 0 : index
    %c0_28 = arith.constant 0 : index
    %c0_29 = arith.constant 0 : index
    %43 = vector.load %arg5[%c0_27, %c0_28, %c0_29] : memref<1x8x128xf32, #tpu.memory_space<vmem>>, vector<1x8x128xf32>
    %44 = vector.shape_cast %43 : vector<1x8x128xf32> to vector<8x128xf32>
    %45 = vector.shape_cast %42 : vector<8x128xf32> to vector<1x8x128xf32>
    tpu.vector_store %arg5[%c0_27, %c0_28, %c0_29], %45 {strides = array<i32>} : memref<1x8x128xf32, #tpu.memory_space<vmem>>, vector<1x8x128xf32>,
    return
  }
  func.func @transform_0(%arg0: i32) -> (i32, i32, i32) {
    %c0_i32 = arith.constant 0 : i32
    %c0_i32_0 = arith.constant 0 : i32
    %c0_i32_1 = arith.constant 0 : i32
    return %arg0, %c0_i32, %c0_i32_0 : i32, i32, i32
  }
  func.func @transform_1(%arg0: i32) -> (i32, i32, i32) {
    %c0_i32 = arith.constant 0 : i32
    %c0_i32_0 = arith.constant 0 : i32
    %c0_i32_1 = arith.constant 0 : i32
    %c0_i32_2 = arith.constant 0 : i32
    return %c0_i32, %c0_i32_0, %c0_i32_1 : i32, i32, i32
  }
  func.func @transform_2(%arg0: i32) -> (i32, i32) {
    %c0_i32 = arith.constant 0 : i32
    %c0_i32_0 = arith.constant 0 : i32
    %c0_i32_1 = arith.constant 0 : i32
    return %c0_i32, %c0_i32_0 : i32, i32
  }
  func.func @transform_3(%arg0: i32) -> (i32, i32) {
    %c0_i32 = arith.constant 0 : i32
    %c0_i32_0 = arith.constant 0 : i32
    %c0_i32_1 = arith.constant 0 : i32
    return %c0_i32, %c0_i32_0 : i32, i32
  }
  func.func @transform_4(%arg0: i32) -> (i32, i32, i32) {
    %c0_i32 = arith.constant 0 : i32
    %c0_i32_0 = arith.constant 0 : i32
    %c0_i32_1 = arith.constant 0 : i32
    return %arg0, %c0_i32, %c0_i32_0 : i32, i32, i32
  }
}

</mosaic_0001>

<llo_original>
// kernel: tpu_custom_call.1
$region0: #{tpu_custom_call.1}
  #allocation0 [shape = 'u32[]', space=smem, size = 0x4, offset = 0x4, fixed_abs, tag = 'smem constant byte address 0x4 - core index']
  #allocation1 [shape = 'u32[144,128]{1,0:T(1,128)}', space=vmem, size = 0x12000, scoped, tag = 'internal scratch']
  %s0 = inlined_call_operand.vmem [shape: f32[2,18,64], index: 0, kind: input, shape index: {}]
  %s1 = inlined_call_operand.hbm [shape: f32[3,64,128], index: 1, kind: input, shape index: {}]
  %s2 = inlined_call_operand.vmem [shape: f32[1,128], index: 2, kind: input, shape index: {}]
  %s3 = inlined_call_operand.vmem [shape: f32[1,128], index: 3, kind: input, shape index: {}]
  %s4 = inlined_call_operand.hbm [shape: f32[2,8,128], index: 4, kind: output, shape index: {}]
  %s5 = sld [smem:[#allocation0]]
  $region53: #{tpu_custom_call.1} parent=0
    _
  %s7 = ssub.s32 1, %s5
  %s8 = scalar_select 0, %s7, %s5
  $region1: #{tpu_custom_call.1} parent=0
    #allocation2 [shape = 'u8[98304]{0}', space=vmem, size = 0x18000, scoped, tag = 'input window, operand 1, single buffered']
    #allocation3 [shape = 's32[2]{0}', space=sflag, size = 0x8, scoped, tag = 'scoped memory for tpu_custom_call.1']
    #allocation4 [shape = 's32[2]{0}', space=sflag, size = 0x8, scoped, tag = 'scoped memory for tpu_custom_call.1']
    #allocation5 [shape = 'u8[8192]{0}', space=vmem, size = 0x2000, scoped, tag = 'output window, operand 0']
    %9 = vsyncpa [#allocation3], 0
    %10 = vsyncpa [#allocation4], 0
    %s11 = scalar_lea.sflag [#allocation4], 1
    %12 = vsyncpa %s11, 0
    loop: start=0, step=1, limit=4
    $region2: #{tpu_custom_call.1} parent=1 // loop_pre_header
      _
    $region3: #{tpu_custom_call.1} parent=1 // loop_header
      %s14 = sphi 0, %s18
      %p15 = scmp.ge.s32.totalorder %s14, 4
      %s24 = sphi 0, %s26
      %s27 = sphi 0, %s24
      %s28 = sphi 0, %s27
      %s44 = sphi 0, %s28
      %s48 = sphi 0, %s48
      %s50 = sphi 0, %s48
      %s51 = sphi 0, %s50
      %s65 = sphi 0, %s51
      %s69 = sphi 0, %s69
      %s71 = sphi 0, %s69
      %s72 = sphi 0, %s71
      %s86 = sphi 0, %s72
      %s90 = sphi 0, %s90
      %s92 = sphi 0, %s90
      %s93 = sphi 0, %s92
      %s107 = sphi 0, %s93
      %s113 = sphi 0, %s115
      %s116 = sphi 0, %s113
      %s117 = sphi 0, %s116
      %s133 = sphi 0, %s117
    $region4: #{tpu_custom_call.1} parent=1 // loop_header_branch
      %17 = sbr.rel (%p15) target = $region8
    $region5: #{tpu_custom_call.1} parent=1 // loop_body
      %s19 = ssub.s32 %s14, 1
      %s20 = ssub.s32 %s14, 2
      %s21 = sadd.s32 %s14, 1
      %s22 = ssub.s32 %s14, %s21
      %p23 = scmp.eq.s32.totalorder %s22, 0
      %s25 = sadd.s32 %s24, 1
      %s26 = scalar_select %p23, %s24, %s25
      %p29 = pneg %p23
      %p30 = scmp.eq.s32.totalorder %s14, 1
      %p31 = por %p29, %p30
      %p32 = scmp.ne.s32.totalorder %s24, %s27
      %p33 = scmp.eq.s32.totalorder %s14, 0
      %p34 = por %p32, %p33
      %p35 = scmp.ne.s32.totalorder %s24, %s27
      %p36 = scmp.eq.s32.totalorder %s19, 1
      %p37 = por %p35, %p36
      %p38 = scmp.ne.s32.totalorder %s27, %s28
      %p39 = scmp.eq.s32.totalorder %s19, 0
      %p40 = por %p38, %p39
      %p41 = scmp.ne.s32.totalorder %s27, %s28
      %p42 = scmp.eq.s32.totalorder %s20, 1
      %p43 = por %p41, %p42
      %p45 = scmp.ne.s32.totalorder %s28, %s44
      %p46 = scmp.eq.s32.totalorder %s20, 0
      %p47 = por %p45, %p46
      %s49 = sadd.s32 %s48, 1
      %p52 = scmp.eq.s32.totalorder %s14, 1
      %p53 = scmp.ne.s32.totalorder %s48, %s50
      %p54 = scmp.eq.s32.totalorder %s14, 0
      %p55 = por %p53, %p54
      %p56 = scmp.ne.s32.totalorder %s48, %s50
      %p57 = scmp.eq.s32.totalorder %s19, 1
      %p58 = por %p56, %p57
      %p59 = scmp.ne.s32.totalorder %s50, %s51
      %p60 = scmp.eq.s32.totalorder %s19, 0
      %p61 = por %p59, %p60
      %p62 = scmp.ne.s32.totalorder %s50, %s51
      %p63 = scmp.eq.s32.totalorder %s20, 1
      %p64 = por %p62, %p63
      %p66 = scmp.ne.s32.totalorder %s51, %s65
      %p67 = scmp.eq.s32.totalorder %s20, 0
      %p68 = por %p66, %p67
      %s70 = sadd.s32 %s69, 1
      %p73 = scmp.eq.s32.totalorder %s14, 1
      %p74 = scmp.ne.s32.totalorder %s69, %s71
      %p75 = scmp.eq.s32.totalorder %s14, 0
      %p76 = por %p74, %p75
      %p77 = scmp.ne.s32.totalorder %s69, %s71
      %p78 = scmp.eq.s32.totalorder %s19, 1
      %p79 = por %p77, %p78
      %p80 = scmp.ne.s32.totalorder %s71, %s72
      %p81 = scmp.eq.s32.totalorder %s19, 0
      %p82 = por %p80, %p81
      %p83 = scmp.ne.s32.totalorder %s71, %s72
      %p84 = scmp.eq.s32.totalorder %s20, 1
      %p85 = por %p83, %p84
      %p87 = scmp.ne.s32.totalorder %s72, %s86
      %p88 = scmp.eq.s32.totalorder %s20, 0
      %p89 = por %p87, %p88
      %s91 = sadd.s32 %s90, 1
      %p94 = scmp.eq.s32.totalorder %s14, 1
      %p95 = scmp.ne.s32.totalorder %s90, %s92
      %p96 = scmp.eq.s32.totalorder %s14, 0
      %p97 = por %p95, %p96
      %p98 = scmp.ne.s32.totalorder %s90, %s92
      %p99 = scmp.eq.s32.totalorder %s19, 1
      %p100 = por %p98, %p99
      %p101 = scmp.ne.s32.totalorder %s92, %s93
      %p102 = scmp.eq.s32.totalorder %s19, 0
      %p103 = por %p101, %p102
      %p104 = scmp.ne.s32.totalorder %s92, %s93
      %p105 = scmp.eq.s32.totalorder %s20, 1
      %p106 = por %p104, %p105
      %p108 = scmp.ne.s32.totalorder %s93, %s107
      %p109 = scmp.eq.s32.totalorder %s20, 0
      %p110 = por %p108, %p109
      %s111 = ssub.s32 %s14, %s21
      %p112 = scmp.eq.s32.totalorder %s111, 0
      %s114 = sadd.s32 %s113, 1
      %s115 = scalar_select %p112, %s113, %s114
      %p118 = pneg %p112
      %p119 = scmp.eq.s32.totalorder %s14, 1
      %p120 = por %p118, %p119
      %p121 = scmp.ne.s32.totalorder %s113, %s116
      %p122 = scmp.eq.s32.totalorder %s14, 0
      %p123 = por %p121, %p122
      %p124 = scmp.ne.s32.totalorder %s113, %s116
      %p125 = scmp.eq.s32.totalorder %s19, 1
      %p126 = por %p124, %p125
      %p127 = scmp.ne.s32.totalorder %s116, %s117
      %p128 = scmp.eq.s32.totalorder %s19, 0
      %p129 = por %p127, %p128
      %p130 = scmp.ne.s32.totalorder %s116, %s117
      %p131 = scmp.eq.s32.totalorder %s20, 1
      %p132 = por %p130, %p131
      %p134 = scmp.ne.s32.totalorder %s117, %s133
      %p135 = scmp.eq.s32.totalorder %s20, 0
      %p136 = por %p134, %p135
      %p137 = scmp.le.s32.totalorder 1, %s14
      %p138 = scmp.lt.s32.totalorder %s14, 3
      %p139 = pnand %p137, %p138
      %p140 = pneg %p139
      // Predicated region
      $region9: #{tpu_custom_call.1} parent=5 // pred_check
        _
      $region10: #{tpu_custom_call.1} parent=5 // pred_check_branch
        %142 = sbr.rel (%p139) target = $region12
      $region11: #{tpu_custom_call.1} parent=5 // pred_region
        %s143 = ssub.s32 %s14, 1
        // Predicated region
        $region13: #{tpu_custom_call.1} parent=11 // pred_check
          %p144 = pneg %p61
        $region14: #{tpu_custom_call.1} parent=11 // pred_check_branch
          %146 = sbr.rel (%p144) target = $region16
        $region15: #{tpu_custom_call.1} parent=11 // pred_region
          %s148 = ssub.s32 3072, 3072
          %149 = vsyncadd [#allocation3], %s148
          %s150 = sshll.u32 [#allocation2], 4
          %s151 = int_to_ptr.vmem [resolvable:$true] %s150
          %156 = dma.hbm_to_vmem [thread:$0]  %s1, 3072, %s151, [#allocation3], 128, 128, 8
        $region16: #{tpu_custom_call.1} parent=11 // pred_fallthru
          _
        // Predicated region
        $region17: #{tpu_custom_call.1} parent=11 // pred_check
          %p157 = pneg %p82
        $region18: #{tpu_custom_call.1} parent=11 // pred_check_branch
          %159 = sbr.rel (%p157) target = $region20
        $region19: #{tpu_custom_call.1} parent=11 // pred_region
          _
        $region20: #{tpu_custom_call.1} parent=11 // pred_fallthru
          _
        // Predicated region
        $region21: #{tpu_custom_call.1} parent=11 // pred_check
          %p160 = pneg %p103
        $region22: #{tpu_custom_call.1} parent=11 // pred_check_branch
          %162 = sbr.rel (%p160) target = $region24
        $region23: #{tpu_custom_call.1} parent=11 // pred_region
          _
        $region24: #{tpu_custom_call.1} parent=11 // pred_fallthru
          _
      $region12: #{tpu_custom_call.1} parent=5 // pred_fallthru
        _
      %p163 = scmp.lt.s32.totalorder %s14, 2
      // Predicated region
      $region25: #{tpu_custom_call.1} parent=5 // pred_check
        %p164 = pneg %p163
      $region26: #{tpu_custom_call.1} parent=5 // pred_check_branch
        %166 = sbr.rel (%p164) target = $region28
      $region27: #{tpu_custom_call.1} parent=5 // pred_region
        // Predicated region
        $region29: #{tpu_custom_call.1} parent=27 // pred_check
          %p167 = pneg %p34
        $region30: #{tpu_custom_call.1} parent=27 // pred_check_branch
          %169 = sbr.rel (%p167) target = $region32
        $region31: #{tpu_custom_call.1} parent=27 // pred_region
          %p170 = scmp.lt.s32.totalorder %s14, 1
          %s171 = scalar_select %p170, %s14, 1
          %s172 = smul.addr %s171, 3
          %s173 = smul.addr %s172, 8
          %s174 = scalar_lea.vmem %s0, %s173
        $region32: #{tpu_custom_call.1} parent=27 // pred_fallthru
          _
      $region28: #{tpu_custom_call.1} parent=5 // pred_fallthru
        _
      %p175 = scmp.le.s32.totalorder 1, %s14
      %p176 = scmp.lt.s32.totalorder %s14, 3
      %p177 = pnand %p175, %p176
      %p178 = pneg %p177
      // Predicated region
      $region33: #{tpu_custom_call.1} parent=5 // pred_check
        _
      $region34: #{tpu_custom_call.1} parent=5 // pred_check_branch
        %180 = sbr.rel (%p177) target = $region36
      $region35: #{tpu_custom_call.1} parent=5 // pred_region
        %s181 = ssub.s32 %s14, 1
        // Predicated region
        $region37: #{tpu_custom_call.1} parent=35 // pred_check
          %p182 = pneg %p61
        $region38: #{tpu_custom_call.1} parent=35 // pred_check_branch
          %184 = sbr.rel (%p182) target = $region40
        $region39: #{tpu_custom_call.1} parent=35 // pred_region
          %185 = dma.done [#allocation3], 3072
        $region40: #{tpu_custom_call.1} parent=35 // pred_fallthru
          _
        %p186 = scmp.lt.s32.totalorder %s19, 1
        %s187 = scalar_select %p186, %s19, 1
        %s188 = smul.addr %s187, 3
        %s189 = smul.addr %s188, 8
        %s190 = scalar_lea.vmem %s0, %s189
        %p191 = pneg %p40
        %p192 = pneg %p37
        %p193 = pneg %p61
        %p194 = pneg %p58
        %p195 = pneg %p82
        %p196 = pneg %p79
        %p197 = pneg %p103
        %p198 = pneg %p100
        %p199 = pneg %p129
        %p200 = pneg %p126
        %s201 = sand.u32 %s116, 1
        %s202 = scalar_lea.sflag [#allocation4], %s201
        %s203 = sand.u32 %s116, 1
        %s204 = smul.addr %s203, 8
        %s205 = scalar_lea.vmem [#allocation5], %s204
        %p206 = scmp.lt.s32.totalorder %s19, 1
        %s207 = scalar_select %p206, %s19, 1
        %s208 = smul.addr %s207, 3
        %s209 = smul.addr %s208, 8
        %s210 = scalar_lea.vmem %s0, %s209
        %v211 = vld [vmem:[%s210] ss:$2 sm:$0xff]
        %v212 = vld [vmem:[#allocation2] sm:$0xff]
        %v213 = vld [vmem:[#allocation2 + $0x8] sm:$0xff]
        %v214 = vld [vmem:[#allocation2 + $0x10] sm:$0xff]
        %v215 = vld [vmem:[#allocation2 + $0x18] sm:$0xff]
        %v216 = vld [vmem:[#allocation2 + $0x20] sm:$0xff]
        %v217 = vld [vmem:[#allocation2 + $0x28] sm:$0xff]
        %v218 = vld [vmem:[#allocation2 + $0x30] sm:$0xff]
        %v219 = vld [vmem:[#allocation2 + $0x38] sm:$0xff]
        %s220 = scalar_lea.vmem %s210, 1
        %v221 = vld [vmem:[%s220] ss:$2 sm:$0xff]
        %s222 = scalar_lea.vmem [#allocation2], 64
        %v223 = vld [vmem:[%s222] sm:$0xff]
        %v224 = vld [vmem:[%s222 + $0x8] sm:$0xff]
        %v225 = vld [vmem:[%s222 + $0x10] sm:$0xff]
        %v226 = vld [vmem:[%s222 + $0x18] sm:$0xff]
        %v227 = vld [vmem:[%s222 + $0x20] sm:$0xff]
        %v228 = vld [vmem:[%s222 + $0x28] sm:$0xff]
        %v229 = vld [vmem:[%s222 + $0x30] sm:$0xff]
        %v230 = vld [vmem:[%s222 + $0x38] sm:$0xff]
        %vm231 = vcmask 523264
        %v233 = vsel %vm231, %v221, 0
        %235 = vmatprep.subr.mxu0 0.0
        %236 = vmatpush1.msra.mxu0 %v223
        %237 = vmatprep.subr.mxu0 0.0
        %238 = vmatpush1.msra.mxu0 %v224
        %239 = vmatprep.subr.mxu0 0.0
        %240 = vmatpush1.msra.mxu0 %v225
        %241 = vmatprep.subr.mxu0 0.0
        %242 = vmatpush1.msra.mxu0 %v226
        %243 = vmatprep.subr.mxu0 0.0
        %244 = vmatpush1.msra.mxu0 %v227
        %245 = vmatprep.subr.mxu0 0.0
        %246 = vmatpush1.msra.mxu0 %v228
        %247 = vmatprep.subr.mxu0 0.0
        %248 = vmatpush1.msra.mxu0 %v229
        %249 = vmatprep.subr.mxu0 0.0
        %250 = vmatpush1.msra.mxu0 %v230
        %251 = vmatprep.subr.mxu0 0.0
        %252 = vmatpush1.msra.mxu0 0.0
        %253 = vmatprep.subr.mxu0 0.0
        %254 = vmatpush1.msra.mxu0 0.0
        %255 = vmatprep.subr.mxu0 0.0
        %256 = vmatpush1.msra.mxu0 0.0
        %257 = vmatprep.subr.mxu0 0.0
        %258 = vmatpush1.msra.mxu0 0.0
        %259 = vmatprep.subr.mxu0 0.0
        %260 = vmatpush1.msra.mxu0 0.0
        %261 = vmatprep.subr.mxu0 0.0
        %262 = vmatpush1.msra.mxu0 0.0
        %263 = vmatprep.subr.mxu0 0.0
        %264 = vmatpush1.msra.mxu0 0.0
        %265 = vmatprep.subr.mxu0 0.0
        %266 = vmatpush1.msra.mxu0 0.0
        %267 = vmatprep.subr.mxu0 0.0
        %268 = vmatpush1.msra.mxu0 0.0
        %269 = vmatprep.subr.mxu0 0.0
        %270 = vmatpush1.msra.mxu0 0.0
        %271 = vmatprep.subr.mxu0 0.0
        %272 = vmatpush1.msra.mxu0 0.0
        %273 = vmatprep.subr.mxu0 0.0
        %274 = vmatpush1.msra.mxu0 0.0
        %275 = vmatprep.subr.mxu0 0.0
        %276 = vmatpush1.msra.mxu0 0.0
        %277 = vmatprep.subr.mxu0 0.0
        %278 = vmatpush1.msra.mxu0 0.0
        %279 = vmatprep.subr.mxu0 0.0
        %280 = vmatpush1.msra.mxu0 0.0
        %281 = vmatprep.subr.mxu0 0.0
        %282 = vmatpush1.msra.mxu0 0.0
        %283 = vmatprep.subr.mxu0 0.0
        %284 = vmatpush1.msra.mxu0 0.0
        %285 = vmatprep.subr.mxu0 0.0
        %286 = vmatpush1.msra.mxu0 0.0
        %287 = vmatprep.subr.mxu0 0.0
        %288 = vmatpush1.msra.mxu0 0.0
        %289 = vmatprep.subr.mxu0 0.0
        %290 = vmatpush1.msra.mxu0 0.0
        %291 = vmatprep.subr.mxu0 0.0
        %292 = vmatpush1.msra.mxu0 0.0
        %293 = vmatprep.subr.mxu0 0.0
        %294 = vmatpush1.msra.mxu0 0.0
        %295 = vmatprep.subr.mxu0 0.0
        %296 = vmatpush1.msra.mxu0 0.0
        %297 = vmatprep.subr.mxu0 0.0
        %298 = vmatpush1.msra.mxu0 0.0
        %299 = vmatprep.mubr.f32.mxu0 0.0
        %300 = vmatmul.mubr.f32.gmra.mrb[0].mxu0 %v233
        %v301 = vpop.f32.mrb[0].mxu0
        %v302 = vadd.f32 0.0, %v301
        %v303 = vpop.f32.mrb[0].mxu0
        %304 = vdwg.mxu0
        %v306 = vsel %vm231, %v211, 0
        %308 = vmatprep.subr.mxu0 0.0
        %309 = vmatpush1.msra.mxu0 %v212
        %310 = vmatprep.subr.mxu0 0.0
        %311 = vmatpush1.msra.mxu0 %v213
        %312 = vmatprep.subr.mxu0 0.0
        %313 = vmatpush1.msra.mxu0 %v214
        %314 = vmatprep.subr.mxu0 0.0
        %315 = vmatpush1.msra.mxu0 %v215
        %316 = vmatprep.subr.mxu0 0.0
        %317 = vmatpush1.msra.mxu0 %v216
        %318 = vmatprep.subr.mxu0 0.0
        %319 = vmatpush1.msra.mxu0 %v217
        %320 = vmatprep.subr.mxu0 0.0
        %321 = vmatpush1.msra.mxu0 %v218
        %322 = vmatprep.subr.mxu0 0.0
        %323 = vmatpush1.msra.mxu0 %v219
        %324 = vmatprep.subr.mxu0 0.0
        %325 = vmatpush1.msra.mxu0 0.0
        %326 = vmatprep.subr.mxu0 0.0
        %327 = vmatpush1.msra.mxu0 0.0
        %328 = vmatprep.subr.mxu0 0.0
        %329 = vmatpush1.msra.mxu0 0.0
        %330 = vmatprep.subr.mxu0 0.0
        %331 = vmatpush1.msra.mxu0 0.0
        %332 = vmatprep.subr.mxu0 0.0
        %333 = vmatpush1.msra.mxu0 0.0
        %334 = vmatprep.subr.mxu0 0.0
        %335 = vmatpush1.msra.mxu0 0.0
        %336 = vmatprep.subr.mxu0 0.0
        %337 = vmatpush1.msra.mxu0 0.0
        %338 = vmatprep.subr.mxu0 0.0
        %339 = vmatpush1.msra.mxu0 0.0
        %340 = vmatprep.subr.mxu0 0.0
        %341 = vmatpush1.msra.mxu0 0.0
        %342 = vmatprep.subr.mxu0 0.0
        %343 = vmatpush1.msra.mxu0 0.0
        %344 = vmatprep.subr.mxu0 0.0
        %345 = vmatpush1.msra.mxu0 0.0
        %346 = vmatprep.subr.mxu0 0.0
        %347 = vmatpush1.msra.mxu0 0.0
        %348 = vmatprep.subr.mxu0 0.0
        %349 = vmatpush1.msra.mxu0 0.0
        %350 = vmatprep.subr.mxu0 0.0
        %351 = vmatpush1.msra.mxu0 0.0
        %352 = vmatprep.subr.mxu0 0.0
        %353 = vmatpush1.msra.mxu0 0.0
        %354 = vmatprep.subr.mxu0 0.0
        %355 = vmatpush1.msra.mxu0 0.0
        %356 = vmatprep.subr.mxu0 0.0
        %357 = vmatpush1.msra.mxu0 0.0
        %358 = vmatprep.subr.mxu0 0.0
        %359 = vmatpush1.msra.mxu0 0.0
        %360 = vmatprep.subr.mxu0 0.0
        %361 = vmatpush1.msra.mxu0 0.0
        %362 = vmatprep.subr.mxu0 0.0
        %363 = vmatpush1.msra.mxu0 0.0
        %364 = vmatprep.subr.mxu0 0.0
        %365 = vmatpush1.msra.mxu0 0.0
        %366 = vmatprep.subr.mxu0 0.0
        %367 = vmatpush1.msra.mxu0 0.0
        %368 = vmatprep.subr.mxu0 0.0
        %369 = vmatpush1.msra.mxu0 0.0
        %370 = vmatprep.subr.mxu0 0.0
        %371 = vmatpush1.msra.mxu0 0.0
        %372 = vmatprep.mubr.f32.mxu0 0.0
        %373 = vmatmul.mubr.f32.gmra.mrb[0].mxu0 %v306
        %v374 = vpop.f32.mrb[0].mxu0
        %v375 = vadd.f32 %v302, %v374
        %v376 = vpop.f32.mrb[0].mxu0
        %377 = vdwg.mxu0
        %s378 = scalar_lea.vmem %s210, 2
        %v379 = vld [vmem:[%s378] ss:$2 sm:$0xff]
        %s380 = scalar_lea.vmem [#allocation2], 128
        %v381 = vld [vmem:[%s380] sm:$0xff]
        %v382 = vld [vmem:[%s380 + $0x8] sm:$0xff]
        %v383 = vld [vmem:[%s380 + $0x10] sm:$0xff]
        %v384 = vld [vmem:[%s380 + $0x18] sm:$0xff]
        %v385 = vld [vmem:[%s380 + $0x20] sm:$0xff]
        %v386 = vld [vmem:[%s380 + $0x28] sm:$0xff]
        %v387 = vld [vmem:[%s380 + $0x30] sm:$0xff]
        %v388 = vld [vmem:[%s380 + $0x38] sm:$0xff]
        %v390 = vsel %vm231, %v379, 0
        %392 = vmatprep.subr.mxu0 0.0
        %393 = vmatpush1.msra.mxu0 %v381
        %394 = vmatprep.subr.mxu0 0.0
        %395 = vmatpush1.msra.mxu0 %v382
        %396 = vmatprep.subr.mxu0 0.0
        %397 = vmatpush1.msra.mxu0 %v383
        %398 = vmatprep.subr.mxu0 0.0
        %399 = vmatpush1.msra.mxu0 %v384
        %400 = vmatprep.subr.mxu0 0.0
        %401 = vmatpush1.msra.mxu0 %v385
        %402 = vmatprep.subr.mxu0 0.0
        %403 = vmatpush1.msra.mxu0 %v386
        %404 = vmatprep.subr.mxu0 0.0
        %405 = vmatpush1.msra.mxu0 %v387
        %406 = vmatprep.subr.mxu0 0.0
        %407 = vmatpush1.msra.mxu0 %v388
        %408 = vmatprep.subr.mxu0 0.0
        %409 = vmatpush1.msra.mxu0 0.0
        %410 = vmatprep.subr.mxu0 0.0
        %411 = vmatpush1.msra.mxu0 0.0
        %412 = vmatprep.subr.mxu0 0.0
        %413 = vmatpush1.msra.mxu0 0.0
        %414 = vmatprep.subr.mxu0 0.0
        %415 = vmatpush1.msra.mxu0 0.0
        %416 = vmatprep.subr.mxu0 0.0
        %417 = vmatpush1.msra.mxu0 0.0
        %418 = vmatprep.subr.mxu0 0.0
        %419 = vmatpush1.msra.mxu0 0.0
        %420 = vmatprep.subr.mxu0 0.0
        %421 = vmatpush1.msra.mxu0 0.0
        %422 = vmatprep.subr.mxu0 0.0
        %423 = vmatpush1.msra.mxu0 0.0
        %424 = vmatprep.subr.mxu0 0.0
        %425 = vmatpush1.msra.mxu0 0.0
        %426 = vmatprep.subr.mxu0 0.0
        %427 = vmatpush1.msra.mxu0 0.0
        %428 = vmatprep.subr.mxu0 0.0
        %429 = vmatpush1.msra.mxu0 0.0
        %430 = vmatprep.subr.mxu0 0.0
        %431 = vmatpush1.msra.mxu0 0.0
        %432 = vmatprep.subr.mxu0 0.0
        %433 = vmatpush1.msra.mxu0 0.0
        %434 = vmatprep.subr.mxu0 0.0
        %435 = vmatpush1.msra.mxu0 0.0
        %436 = vmatprep.subr.mxu0 0.0
        %437 = vmatpush1.msra.mxu0 0.0
        %438 = vmatprep.subr.mxu0 0.0
        %439 = vmatpush1.msra.mxu0 0.0
        %440 = vmatprep.subr.mxu0 0.0
        %441 = vmatpush1.msra.mxu0 0.0
        %442 = vmatprep.subr.mxu0 0.0
        %443 = vmatpush1.msra.mxu0 0.0
        %444 = vmatprep.subr.mxu0 0.0
        %445 = vmatpush1.msra.mxu0 0.0
        %446 = vmatprep.subr.mxu0 0.0
        %447 = vmatpush1.msra.mxu0 0.0
        %448 = vmatprep.subr.mxu0 0.0
        %449 = vmatpush1.msra.mxu0 0.0
        %450 = vmatprep.subr.mxu0 0.0
        %451 = vmatpush1.msra.mxu0 0.0
        %452 = vmatprep.subr.mxu0 0.0
        %453 = vmatpush1.msra.mxu0 0.0
        %454 = vmatprep.subr.mxu0 0.0
        %455 = vmatpush1.msra.mxu0 0.0
        %456 = vmatprep.mubr.f32.mxu0 0.0
        %457 = vmatmul.mubr.f32.gmra.mrb[0].mxu0 %v390
        %v458 = vpop.f32.mrb[0].mxu0
        %v459 = vadd.f32 0.0, %v458
        %v460 = vpop.f32.mrb[0].mxu0
        %461 = vdwg.mxu0
        %v462 = vadd.f32 %v375, %v459
        %463 = vadd.xlane.f32.xlu0 %v462
        %v464 = vpop.xlane.xlu0 %463
        %v465 = vrcp.pop 128.0
        %v466 = vmul.f32 %v464, %v465
        %v467 = vsub.f32 %v462, %v466
        %v468 = vmul.f32 %v467, %v467
        %469 = vadd.xlane.f32.xlu0 %v468
        %v470 = vpop.xlane.xlu0 %469
        %v471 = vmul.f32 %v470, %v465
        %v472 = vadd.f32 %v471, 1e-05
        %v473 = vrsqrt.pop %v472
        %v474 = vmul.f32 %v467, %v473
        %v475 = vld [vmem:[%s2] sm:$0x1]
        %v477 = vlaneseq
        %v478 = vshrl.u32 %v477, 7
        %v479 = vsub.s32 0, %v478
        %v480 = vrot.slane %v475, %v479
        %v482 = vmul.f32 %v474, %v480
        %v483 = vld [vmem:[%s3] sm:$0x1]
        %v485 = vlaneseq
        %v486 = vshrl.u32 %v485, 7
        %v487 = vsub.s32 0, %v486
        %v488 = vrot.slane %v483, %v487
        %v490 = vadd.f32 %v482, %v488
        %491 = vst [vmem:[%s205] sm:$0xff] %v490
        %s492 = sand.u32 %s116, 1
        %s493 = scalar_lea.sflag [#allocation4], %s492
        %s494 = sand.u32 %s116, 1
        %s495 = smul.addr %s494, 8
        %s496 = scalar_lea.vmem [#allocation5], %s495
        // Predicated region
        $region41: #{tpu_custom_call.1} parent=35 // pred_check
          %p497 = pneg %p126
        $region42: #{tpu_custom_call.1} parent=35 // pred_check_branch
          %499 = sbr.rel (%p497) target = $region44
        $region43: #{tpu_custom_call.1} parent=35 // pred_region
          %s501 = ssub.s32 128, 128
          %502 = vsyncadd %s493, %s501
          %s503 = smul.addr %s19, 128
          %s504 = scalar_lea.hbm %s4, %s503
          %s506 = sshll.u32 %s496, 4
          %s507 = int_to_ptr.vmem [resolvable:$true] %s506
          %509 = dma.vmem_to_hbm [thread:$0]  %s507, 128, %s504, %s493
        $region44: #{tpu_custom_call.1} parent=35 // pred_fallthru
          _
      $region36: #{tpu_custom_call.1} parent=5 // pred_fallthru
        _
      %p510 = scmp.le.s32.totalorder 2, %s14
      // Predicated region
      $region45: #{tpu_custom_call.1} parent=5 // pred_check
        %p511 = pneg %p510
      $region46: #{tpu_custom_call.1} parent=5 // pred_check_branch
        %513 = sbr.rel (%p511) target = $region48
      $region47: #{tpu_custom_call.1} parent=5 // pred_region
        %s514 = ssub.s32 %s14, 2
        // Predicated region
        $region49: #{tpu_custom_call.1} parent=47 // pred_check
          %p515 = pneg %p132
        $region50: #{tpu_custom_call.1} parent=47 // pred_check_branch
          %517 = sbr.rel (%p515) target = $region52
        $region51: #{tpu_custom_call.1} parent=47 // pred_region
          %s518 = sand.u32 %s117, 1
          %s519 = scalar_lea.sflag [#allocation4], %s518
          %s520 = sand.u32 %s117, 1
          %s521 = smul.addr %s520, 8
          %s522 = scalar_lea.vmem [#allocation5], %s521
          %523 = dma.done %s519, 128
        $region52: #{tpu_custom_call.1} parent=47 // pred_fallthru
          _
      $region48: #{tpu_custom_call.1} parent=5 // pred_fallthru
        _
    $region6: #{tpu_custom_call.1} parent=1 // loop_footer
      %s18 = sadd.s32 1, %s14
    $region7: #{tpu_custom_call.1} parent=1 // loop_footer_branch
      %13 = sbr.rel target = $region3
    $region8: #{tpu_custom_call.1} parent=1 // loop_exit
      _
    %524 = vsyncpa [#allocation3], 1
    %s525 = scalar_lea.sflag [#allocation3], 1
    %526 = vsyncpa %s525, 1
    %527 = vsyncpa [#allocation4], 1
    %s528 = scalar_lea.sflag [#allocation4], 1
    %529 = vsyncpa %s528, 1

</llo_original>
